<compile_context>
chip_gen: v5e
topology: v5e:2x2
jax: 0.10.0
libtpu: 0.0.40
codegen_flags: <defaults>
</compile_context>

<pallas_src>
import functools
import math

import jax
import jax.numpy as jnp
from jax.experimental import pallas as pl
from jax.experimental.pallas import tpu as pltpu


def _round_up(x, m):
    return (x + m - 1) // m * m


def _leaky_relu(x, alpha):
    if 0.0 <= alpha <= 1.0:
        return jnp.maximum(x, x * alpha)          # one VPU max for the common case
    return jnp.where(x > 0, x, alpha * x)


def _vmem_limit_bytes():
    # ~96 MiB on v5e/v6e (128 MiB physical), ~48 MiB on v7x (64 MiB physical).
    cap = 64 * 1024 * 1024
    try:
        info = pltpu.get_tpu_info()
        cap = int(getattr(info, "vmem_capacity_bytes", cap))
    except Exception:
        pass
    return int(min(cap * 3 // 4, 100 * 1024 * 1024))


# ----------------------------------------------------------------------------- pass 1
def _proj_kernel(inp_ref, w_ref, a12_ref, h_ref, f12_ref, *, fout, fp):
    # h tile in f32 (keeps the attention logits precise); stored bf16 for pass 2.
    h = jnp.dot(inp_ref[...], w_ref[...], preferred_element_type=jnp.float32)
    f12_ref[...] = jnp.dot(h, a12_ref[...], preferred_element_type=jnp.float32)
    if fp > fout:
        # "ones column": column `fout` of h is set to 1 so that (p @ h)[:, fout]
        # is the softmax denominator — no in-kernel N^2 row-sum needed in pass 2.
        lane = jax.lax.broadcasted_iota(jnp.int32, h.shape, 1)
        h = jnp.where(lane == fout, 1.0, h)
    h_ref[...] = h.astype(jnp.bfloat16)


# ----------------------------------------------------------------------------- pass 2
def _attn_kernel(fm_ref, f2_ref, adj_ref, h_ref, out_ref, acc_ref, den_ref,
                 *, alpha, concat, fout, fp):
    j = pl.program_id(1)
    use_ones_col = fp > fout

    @pl.when(j == 0)
    def _():
        acc_ref[...] = jnp.zeros_like(acc_ref)
        if not use_ones_col:
            den_ref[...] = jnp.zeros_like(den_ref)

    f1 = fm_ref[:, 0:1]                              # [TM, 1]
    m = fm_ref[:, 1:2]                               # [TM, 1] precomputed stability bound
    e = _leaky_relu(f1 + f2_ref[...], alpha)         # [TM,1] + [1,TK] -> [TM,TK]

    # direct integer compare on the int8 adjacency block (no f32 widen pass)
    mask = adj_ref[...] != 0
    logits = jnp.where(mask, e - m, -1.0e30)         # unmasked logits <= ~0

    # exp in bf16 (EUP bf16 path on v6e/v7x); p is already the MXU operand dtype.
    p = jnp.exp(logits.astype(jnp.bfloat16))         # [TM, TK] bf16

    acc_ref[...] += jnp.dot(p, h_ref[...], preferred_element_type=jnp.float32)
    if not use_ones_col:
        den_ref[...] += jnp.sum(p.astype(jnp.float32), axis=1, keepdims=True)

    @pl.when(j == pl.num_programs(1) - 1)
    def _():
        acc = acc_ref[...]
        if use_ones_col:
            denom = acc[:, fout:fout + 1]            # ones-column = sum_j p[i, j]
        else:
            denom = den_ref[...]
        denom = jnp.maximum(denom, 1.0e-30)          # padded / isolated rows -> 0, not NaN
        hp = acc * pl.reciprocal(denom, approx=True) # EUP slot, ~free
        if concat:
            hp = jnp.where(hp > 0, hp, jnp.exp(hp) - 1.0)   # ELU
        out_ref[...] = hp.astype(out_ref.dtype)


# ----------------------------------------------------------------------------- wrapper
def gat_layer(inp, adj, W, a, *, alpha=0.2, concat=True, tm=256, tk=256):
    # tm = tk = 256 fills the 256-wide MXU on v6e/v7x; prefer tm = tk = 128 on v5e.
    N, fin = inp.shape
    fout = W.shape[1]
    fp = _round_up(fout, 128)      # lane-dense output stores (spare column for denom)
    npad = _round_up(N, max(tm, tk))

    # Zero padding never changes the math: padded adj entries are 0 (masked out),
    # padded W/a entries are 0 (zero h columns / zero logit contribution).
    inp_p = jnp.zeros((npad, fin), jnp.float32).at[:N].set(inp.astype(jnp.float32))
    w_p = jnp.zeros((fin, fp), jnp.float32).at[:, :fout].set(W.astype(jnp.float32))
    a12 = (jnp.zeros((fp, 2), jnp.float32)
           .at[:fout, 0].set(a[:fout, 0].astype(jnp.float32))
           .at[:fout, 1].set(a[fout:2 * fout, 0].astype(jnp.float32)))

    # Reuse a caller-provided padded int8 adjacency (e.g. across heads/layers);
    # otherwise build it once.
    if adj.dtype == jnp.int8 and adj.shape == (npad, npad):
        adj_i8 = adj
    else:
        adj_i8 = (jnp.zeros((npad, npad), jnp.int8)
                  .at[:N, :N].set((adj > 0).astype(jnp.int8)))

    vmem_limit = _vmem_limit_bytes()
    grid1 = (npad // tm,)
    cparams1 = pltpu.CompilerParams(dimension_semantics=("parallel",),
                                    vmem_limit_bytes=vmem_limit)

    # ---- pass 1: h = inp @ W (bf16 out, ones column), f12 = h @ [a1|a2] ----
    proj = functools.partial(_proj_kernel, fout=fout, fp=fp)
    h_bf16, f12 = pl.pallas_call(
        proj,
        out_shape=(jax.ShapeDtypeStruct((npad, fp), jnp.bfloat16),
                   jax.ShapeDtypeStruct((npad, 2), jnp.float32)),
        grid_spec=pltpu.PrefetchScalarGridSpec(
            num_scalar_prefetch=0, grid=grid1,
            in_specs=[pl.BlockSpec((tm, fin), lambda i: (i, 0)),
                      pl.BlockSpec((fin, fp), lambda i: (0, 0)),
                      pl.BlockSpec((fp, 2), lambda i: (0, 0))],
            out_specs=[pl.BlockSpec((tm, fp), lambda i: (i, 0)),
                       pl.BlockSpec((tm, 2), lambda i: (i, 0))]),
        compiler_params=cparams1,
        cost_estimate=pl.CostEstimate(
            flops=int(2 * npad * fin * fp + 4 * npad * fp),
            transcendentals=0,
            bytes_accessed=int(npad * fin * 4 + fin * fp * 4 + npad * fp * 2 + npad * 8)),
    )(inp_p, w_p, a12)

    # O(N) XLA prologue: per-row softmax stability bound m_i = LeakyReLU(f1_i + max_j f2_j)
    f1 = f12[:, 0:1]                                     # [Np, 1]
    f2_row = f12[:, 1].reshape(1, npad)                  # [1, Np]
    f2max = jnp.max(f12[:N, 1])                          # global max over real columns
    m = _leaky_relu(f1 + f2max, alpha)                   # [Np, 1], >= every unmasked logit
    fm = jnp.concatenate([f1, m], axis=1)                # [Np, 2]

    # ---- pass 2: masked softmax attention + att @ h + ELU (2-D tiled) ----
    grid2 = (npad // tm, npad // tk)
    cparams2 = pltpu.CompilerParams(dimension_semantics=("parallel", "arbitrary"),
                                    vmem_limit_bytes=vmem_limit)
    kernel = functools.partial(_attn_kernel, alpha=alpha, concat=concat, fout=fout, fp=fp)
    n_i = grid2[0]
    out_p = pl.pallas_call(
        kernel,
        out_shape=jax.ShapeDtypeStruct((npad, fp), jnp.float32),
        grid_spec=pltpu.PrefetchScalarGridSpec(
            num_scalar_prefetch=0, grid=grid2,
            in_specs=[pl.BlockSpec((tm, 2), lambda i, j: (i, 0)),      # [f1 | m] row tile
                      pl.BlockSpec((1, tk), lambda i, j: (0, j)),      # f2 column tile
                      pl.BlockSpec((tm, tk), lambda i, j: (i, j)),     # adj int8 block
                      pl.BlockSpec((tk, fp), lambda i, j: (j, 0))],    # h bf16 column block
            out_specs=pl.BlockSpec((tm, fp), lambda i, j: (i, 0)),     # resident per row tile
            scratch_shapes=[pltpu.VMEM((tm, fp), jnp.float32),         # f32 accumulator
                            pltpu.VMEM((tm, 1), jnp.float32)]),        # denom (fallback only)
        compiler_params=cparams2,
        cost_estimate=pl.CostEstimate(
            flops=int(2 * npad * npad * fp + 7 * npad * npad),
            transcendentals=int(npad * npad + npad * fp),
            bytes_accessed=int(npad * npad * 1 + n_i * npad * fp * 2
                               + npad * fp * 4 + n_i * npad * 4 + npad * 8)),
    )(fm, f2_row, adj_i8, h_bf16)

    return out_p[:N, :fout]


def _xavier_uniform(key, shape, gain):
    fan_in, fan_out = shape[0], shape[1]
    bound = gain * math.sqrt(6.0 / (fan_in + fan_out))
    return jax.random.uniform(key, shape, jnp.float32, -bound, bound)


if __name__ == "__main__":
    # Small shapes (exercise row padding 200->256 and feature padding 64->128)
    N, in_features, out_features = 200, 48, 64
    alpha, concat = 0.2, True

    key = jax.random.PRNGKey(0)
    k_w, k_a, k_x, k_adj = jax.random.split(key, 4)

    # Deterministic parameter init (matches nn.init.xavier_uniform_(gain=1.414))
    W = _xavier_uniform(k_w, (in_features, out_features), gain=1.414)
    a = _xavier_uniform(k_a, (2 * out_features, 1), gain=1.414)

    inp = jax.random.normal(k_x, (N, in_features), jnp.float32)
    adj = (jax.random.uniform(k_adj, (N, N)) > 0.5).astype(jnp.float32)
    adj = jnp.maximum(adj, jnp.eye(N, dtype=jnp.float32))  # self-loops

    out = gat_layer(inp, adj, W, a, alpha=alpha, concat=concat)
    jax.block_until_ready(out)

    # Pure-JAX f32 reference (same math as the PyTorch forward in eval mode).
    h = inp @ W
    e = h @ a[:out_features] + (h @ a[out_features:]).T
    e = jnp.where(e > 0, e, alpha * e)
    logits = jnp.where(adj > 0, e, -1.0e12)
    att = jax.nn.softmax(logits, axis=1)
    hp = att @ h
    ref = jnp.where(hp > 0, hp, jnp.exp(hp) - 1.0)

    err = float(jnp.max(jnp.abs(out - ref)))
    # Tolerance loosened for bf16 exp + bf16 MXU operands (f32 accumulation).
    assert jnp.allclose(out, ref, atol=5e-2, rtol=5e-2), f"mismatch vs reference (max err {err})"

    print("KERNEL_OK")
</pallas_src>

<mosaic_0001>
module attributes {stable_mosaic.version = 11 : i64} {
  func.func @_proj_kernel(%arg0: i32, %arg1: memref<256x48xf32, #tpu.memory_space<vmem>>, %arg2: memref<48x128xf32, #tpu.memory_space<vmem>>, %arg3: memref<128x2xf32, #tpu.memory_space<vmem>>, %arg4: memref<256x128xbf16, #tpu.memory_space<vmem>>, %arg5: memref<256x2xf32, #tpu.memory_space<vmem>>) attributes {dimension_semantics = [#tpu.dimension_semantics<parallel>], iteration_bounds = array<i64: 1>, scalar_prefetch = 0 : i64, scratch_operands = 0 : i64, tpu.core_type = #tpu.core_type<tc>, window_params = [{transform_indices = @transform_0, window_bounds = array<i64: 256, 48>}, {pipeline_mode = #tpu.pipeline_mode<synchronous>, transform_indices = @transform_1, window_bounds = array<i64: 48, 128>}, {pipeline_mode = #tpu.pipeline_mode<synchronous>, transform_indices = @transform_2, window_bounds = array<i64: 128, 2>}, {transform_indices = @transform_3, window_bounds = array<i64: 256, 128>}, {transform_indices = @transform_4, window_bounds = array<i64: 256, 2>}]} {
    %c0 = arith.constant 0 : index
    %c0_0 = arith.constant 0 : index
    %0 = vector.load %arg1[%c0, %c0_0] : memref<256x48xf32, #tpu.memory_space<vmem>>, vector<256x48xf32>
    %c0_1 = arith.constant 0 : index
    %c0_2 = arith.constant 0 : index
    %1 = vector.load %arg2[%c0_1, %c0_2] : memref<48x128xf32, #tpu.memory_space<vmem>>, vector<48x128xf32>
    %cst = arith.constant dense<0.000000e+00> : vector<256x128xf32>
    %2 = tpu.matmul %0, %1, %cst {dimension_numbers = #tpu.dot_dimension_numbers<[1], [0], [0], [1], [0, 0, 1, 1], [], []>} : vector<256x48xf32>, vector<48x128xf32>, vector<256x128xf32> -> vector<256x128xf32>
    %c0_3 = arith.constant 0 : index
    %c0_4 = arith.constant 0 : index
    %3 = vector.load %arg3[%c0_3, %c0_4] : memref<128x2xf32, #tpu.memory_space<vmem>>, vector<128x2xf32>
    %cst_5 = arith.constant dense<0.000000e+00> : vector<256x2xf32>
    %4 = tpu.matmul %2, %3, %cst_5 {dimension_numbers = #tpu.dot_dimension_numbers<[1], [0], [0], [1], [0, 0, 1, 1], [], []>} : vector<256x128xf32>, vector<128x2xf32>, vector<256x2xf32> -> vector<256x2xf32>
    %c0_6 = arith.constant 0 : index
    %c0_7 = arith.constant 0 : index
    %5 = vector.load %arg5[%c0_6, %c0_7] : memref<256x2xf32, #tpu.memory_space<vmem>>, vector<256x2xf32>
    tpu.vector_store %arg5[%c0_6, %c0_7], %4 {strides = array<i32>} : memref<256x2xf32, #tpu.memory_space<vmem>>, vector<256x2xf32>,
    %6 = tpu.iota {dimensions = array<i32: 1>} : vector<256x128xi32>
    %c64_i32 = arith.constant 64 : i32
    %7 = vector.broadcast %c64_i32 : i32 to vector<256x128xi32>
    %8 = arith.cmpi eq, %6, %7 : vector<256x128xi32>
    %cst_8 = arith.constant 1.000000e+00 : f32
    %9 = vector.broadcast %cst_8 : f32 to vector<256x128xf32>
    %10 = arith.select %8, %9, %2 : vector<256x128xi1>, vector<256x128xf32>
    %11 = arith.truncf %10 : vector<256x128xf32> to vector<256x128xbf16>
    %c0_9 = arith.constant 0 : index
    %c0_10 = arith.constant 0 : index
    %12 = vector.load %arg4[%c0_9, %c0_10] : memref<256x128xbf16, #tpu.memory_space<vmem>>, vector<256x128xbf16>
    tpu.vector_store %arg4[%c0_9, %c0_10], %11 {strides = array<i32>} : memref<256x128xbf16, #tpu.memory_space<vmem>>, vector<256x128xbf16>,
    return
  }
  func.func @transform_0(%arg0: i32) -> (i32, i32) {
    %c0_i32 = arith.constant 0 : i32
    %c0_i32_0 = arith.constant 0 : i32
    return %arg0, %c0_i32 : i32, i32
  }
  func.func @transform_1(%arg0: i32) -> (i32, i32) {
    %c0_i32 = arith.constant 0 : i32
    %c0_i32_0 = arith.constant 0 : i32
    %c0_i32_1 = arith.constant 0 : i32
    return %c0_i32, %c0_i32_0 : i32, i32
  }
  func.func @transform_2(%arg0: i32) -> (i32, i32) {
    %c0_i32 = arith.constant 0 : i32
    %c0_i32_0 = arith.constant 0 : i32
    %c0_i32_1 = arith.constant 0 : i32
    return %c0_i32, %c0_i32_0 : i32, i32
  }
  func.func @transform_3(%arg0: i32) -> (i32, i32) {
    %c0_i32 = arith.constant 0 : i32
    %c0_i32_0 = arith.constant 0 : i32
    return %arg0, %c0_i32 : i32, i32
  }
  func.func @transform_4(%arg0: i32) -> (i32, i32) {
    %c0_i32 = arith.constant 0 : i32
    %c0_i32_0 = arith.constant 0 : i32
    return %arg0, %c0_i32 : i32, i32
  }
}

</mosaic_0001>

<llo_original>
// kernel: tpu_custom_call.1
$region0: #{tpu_custom_call.1}
  #allocation0 [shape = 'u32[]', space=smem, size = 0x4, offset = 0x4, fixed_abs, tag = 'smem constant byte address 0x4 - core index']
  #allocation1 [shape = 'u32[72,128]{1,0:T(1,128)}', space=vmem, size = 0x9000, scoped, tag = 'internal scratch']
  %s0 = inlined_call_operand.vmem [shape: f32[256,48], index: 0, kind: input, shape index: {}]
  %s1 = inlined_call_operand.vmem [shape: f32[48,128], index: 1, kind: input, shape index: {}]
  %s2 = inlined_call_operand.vmem [shape: f32[128,2], index: 2, kind: input, shape index: {}]
  %s3 = inlined_call_operand.hbm [shape: bf16[256,128], index: 3, kind: output, shape index: {0}]
  %s4 = inlined_call_operand.vmem [shape: f32[256,2], index: 4, kind: output, shape index: {1}]
  %5 = xla_tuple %s3, %s4
  %s6 = sld [smem:[#allocation0]]
  $region30: #{tpu_custom_call.1} parent=0
    _
  %s8 = ssub.s32 1, %s6
  %s9 = scalar_select 0, %s8, %s6
  $region1: #{tpu_custom_call.1} parent=0
    #allocation2 [shape = 'u8[65536]{0}', space=vmem, size = 0x10000, scoped, tag = 'output window, operand 0, single buffered']
    #allocation3 [shape = 's32[1]{0}', space=sflag, size = 0x4, scoped, tag = 'scoped memory for tpu_custom_call.1']
    %10 = vsyncpa [#allocation3], 0
    // Predicated region
    $region2: #{tpu_custom_call.1} parent=1 // pred_check
      _
    $region3: #{tpu_custom_call.1} parent=1 // pred_check_branch
      %12 = sbr.rel (0) target = $region5
    $region4: #{tpu_custom_call.1} parent=1 // pred_region
      _
    $region5: #{tpu_custom_call.1} parent=1 // pred_fallthru
      _
    // Predicated region
    $region6: #{tpu_custom_call.1} parent=1 // pred_check
      _
    $region7: #{tpu_custom_call.1} parent=1 // pred_check_branch
      %14 = sbr.rel (0) target = $region9
    $region8: #{tpu_custom_call.1} parent=1 // pred_region
      _
    $region9: #{tpu_custom_call.1} parent=1 // pred_fallthru
      _
    // Predicated region
    $region10: #{tpu_custom_call.1} parent=1 // pred_check
      _
    $region11: #{tpu_custom_call.1} parent=1 // pred_check_branch
      %16 = sbr.rel (0) target = $region13
    $region12: #{tpu_custom_call.1} parent=1 // pred_region
      _
    $region13: #{tpu_custom_call.1} parent=1 // pred_fallthru
      _
    %v17 = vld [vmem:[%s0] sm:$0xff]
    %v18 = vld [vmem:[%s0 + $0x8] sm:$0xff]
    %v19 = vld [vmem:[%s0 + $0x10] sm:$0xff]
    %v20 = vld [vmem:[%s0 + $0x18] sm:$0xff]
    %v21 = vld [vmem:[%s0 + $0x20] sm:$0xff]
    %v22 = vld [vmem:[%s0 + $0x28] sm:$0xff]
    %v23 = vld [vmem:[%s0 + $0x30] sm:$0xff]
    %v24 = vld [vmem:[%s0 + $0x38] sm:$0xff]
    %v25 = vld [vmem:[%s0 + $0x40] sm:$0xff]
    %v26 = vld [vmem:[%s0 + $0x48] sm:$0xff]
    %v27 = vld [vmem:[%s0 + $0x50] sm:$0xff]
    %v28 = vld [vmem:[%s0 + $0x58] sm:$0xff]
    %v29 = vld [vmem:[%s0 + $0x60] sm:$0xff]
    %v30 = vld [vmem:[%s0 + $0x68] sm:$0xff]
    %v31 = vld [vmem:[%s0 + $0x70] sm:$0xff]
    %v32 = vld [vmem:[%s0 + $0x78] sm:$0xff]
    %v33 = vld [vmem:[%s0 + $0x80] sm:$0xff]
    %v34 = vld [vmem:[%s0 + $0x88] sm:$0xff]
    %v35 = vld [vmem:[%s0 + $0x90] sm:$0xff]
    %v36 = vld [vmem:[%s0 + $0x98] sm:$0xff]
    %v37 = vld [vmem:[%s0 + $0xa0] sm:$0xff]
    %v38 = vld [vmem:[%s0 + $0xa8] sm:$0xff]
    %v39 = vld [vmem:[%s0 + $0xb0] sm:$0xff]
    %v40 = vld [vmem:[%s0 + $0xb8] sm:$0xff]
    %v41 = vld [vmem:[%s0 + $0xc0] sm:$0xff]
    %v42 = vld [vmem:[%s0 + $0xc8] sm:$0xff]
    %v43 = vld [vmem:[%s0 + $0xd0] sm:$0xff]
    %v44 = vld [vmem:[%s0 + $0xd8] sm:$0xff]
    %v45 = vld [vmem:[%s0 + $0xe0] sm:$0xff]
    %v46 = vld [vmem:[%s0 + $0xe8] sm:$0xff]
    %v47 = vld [vmem:[%s0 + $0xf0] sm:$0xff]
    %v48 = vld [vmem:[%s0 + $0xf8] sm:$0xff]
    %v49 = vld [vmem:[%s1] sm:$0xff]
    %v50 = vld [vmem:[%s1 + $0x8] sm:$0xff]
    %v51 = vld [vmem:[%s1 + $0x10] sm:$0xff]
    %v52 = vld [vmem:[%s1 + $0x18] sm:$0xff]
    %v53 = vld [vmem:[%s1 + $0x20] sm:$0xff]
    %v54 = vld [vmem:[%s1 + $0x28] sm:$0xff]
    %vm55 = vcmask 392192
    %v57 = vsel %vm55, %v17, 0
    %v60 = vsel %vm55, %v18, 0
    %v63 = vsel %vm55, %v19, 0
    %v66 = vsel %vm55, %v20, 0
    %v69 = vsel %vm55, %v21, 0
    %v72 = vsel %vm55, %v22, 0
    %v75 = vsel %vm55, %v23, 0
    %v78 = vsel %vm55, %v24, 0
    %v81 = vsel %vm55, %v25, 0
    %v84 = vsel %vm55, %v26, 0
    %v87 = vsel %vm55, %v27, 0
    %v90 = vsel %vm55, %v28, 0
    %v93 = vsel %vm55, %v29, 0
    %v96 = vsel %vm55, %v30, 0
    %v99 = vsel %vm55, %v31, 0
    %v102 = vsel %vm55, %v32, 0
    %v105 = vsel %vm55, %v33, 0
    %v108 = vsel %vm55, %v34, 0
    %v111 = vsel %vm55, %v35, 0
    %v114 = vsel %vm55, %v36, 0
    %v117 = vsel %vm55, %v37, 0
    %v120 = vsel %vm55, %v38, 0
    %v123 = vsel %vm55, %v39, 0
    %v126 = vsel %vm55, %v40, 0
    %v129 = vsel %vm55, %v41, 0
    %v132 = vsel %vm55, %v42, 0
    %v135 = vsel %vm55, %v43, 0
    %v138 = vsel %vm55, %v44, 0
    %v141 = vsel %vm55, %v45, 0
    %v144 = vsel %vm55, %v46, 0
    %v147 = vsel %vm55, %v47, 0
    %v150 = vsel %vm55, %v48, 0
    %152 = vmatpush.msra.mxu0 0.0
    %153 = vmatpush.msra.mxu0 0.0
    %154 = vmatpush.msra.mxu0 0.0
    %155 = vmatpush.msra.mxu0 0.0
    %156 = vmatpush.msra.mxu0 0.0
    %157 = vmatpush.msra.mxu0 0.0
    %158 = vmatpush.msra.mxu0 0.0
    %159 = vmatpush.msra.mxu0 0.0
    %160 = vmatpush.msra.mxu0 0.0
    %161 = vmatpush.msra.mxu0 0.0
    %162 = vmatpush.msra.mxu0 %v54
    %163 = vmatpush.msra.mxu0 %v53
    %164 = vmatpush.msra.mxu0 %v52
    %165 = vmatpush.msra.mxu0 %v51
    %166 = vmatpush.msra.mxu0 %v50
    %167 = vmatpush.msra.mxu0 %v49
    %168 = vmatmul.f32.gmra.mxu0 %v57
    %v169 = vpop.f32.mrf.mxu0
    %v170 = vadd.f32 0.0, %v169
    %171 = vmatmul.f32.gmra.mxu0 %v60
    %v172 = vpop.f32.mrf.mxu0
    %v173 = vadd.f32 0.0, %v172
    %174 = vmatmul.f32.gmra.mxu0 %v63
    %v175 = vpop.f32.mrf.mxu0
    %v176 = vadd.f32 0.0, %v175
    %177 = vmatmul.f32.gmra.mxu0 %v66
    %v178 = vpop.f32.mrf.mxu0
    %v179 = vadd.f32 0.0, %v178
    %180 = vmatmul.f32.gmra.mxu0 %v69
    %v181 = vpop.f32.mrf.mxu0
    %v182 = vadd.f32 0.0, %v181
    %183 = vmatmul.f32.gmra.mxu0 %v72
    %v184 = vpop.f32.mrf.mxu0
    %v185 = vadd.f32 0.0, %v184
    %186 = vmatmul.f32.gmra.mxu0 %v75
    %v187 = vpop.f32.mrf.mxu0
    %v188 = vadd.f32 0.0, %v187
    %189 = vmatmul.f32.gmra.mxu0 %v78
    %v190 = vpop.f32.mrf.mxu0
    %v191 = vadd.f32 0.0, %v190
    %192 = vmatmul.f32.gmra.mxu0 %v81
    %v193 = vpop.f32.mrf.mxu0
    %v194 = vadd.f32 0.0, %v193
    %195 = vmatmul.f32.gmra.mxu0 %v84
    %v196 = vpop.f32.mrf.mxu0
    %v197 = vadd.f32 0.0, %v196
    %198 = vmatmul.f32.gmra.mxu0 %v87
    %v199 = vpop.f32.mrf.mxu0
    %v200 = vadd.f32 0.0, %v199
    %201 = vmatmul.f32.gmra.mxu0 %v90
    %v202 = vpop.f32.mrf.mxu0
    %v203 = vadd.f32 0.0, %v202
    %204 = vmatmul.f32.gmra.mxu0 %v93
    %v205 = vpop.f32.mrf.mxu0
    %v206 = vadd.f32 0.0, %v205
    %207 = vmatmul.f32.gmra.mxu0 %v96
    %v208 = vpop.f32.mrf.mxu0
    %v209 = vadd.f32 0.0, %v208
    %210 = vmatmul.f32.gmra.mxu0 %v99
    %v211 = vpop.f32.mrf.mxu0
    %v212 = vadd.f32 0.0, %v211
    %213 = vmatmul.f32.gmra.mxu0 %v102
    %v214 = vpop.f32.mrf.mxu0
    %v215 = vadd.f32 0.0, %v214
    %216 = vmatmul.f32.gmra.mxu0 %v105
    %v217 = vpop.f32.mrf.mxu0
    %v218 = vadd.f32 0.0, %v217
    %219 = vmatmul.f32.gmra.mxu0 %v108
    %v220 = vpop.f32.mrf.mxu0
    %v221 = vadd.f32 0.0, %v220
    %222 = vmatmul.f32.gmra.mxu0 %v111
    %v223 = vpop.f32.mrf.mxu0
    %v224 = vadd.f32 0.0, %v223
    %225 = vmatmul.f32.gmra.mxu0 %v114
    %v226 = vpop.f32.mrf.mxu0
    %v227 = vadd.f32 0.0, %v226
    %228 = vmatmul.f32.gmra.mxu0 %v117
    %v229 = vpop.f32.mrf.mxu0
    %v230 = vadd.f32 0.0, %v229
    %231 = vmatmul.f32.gmra.mxu0 %v120
    %v232 = vpop.f32.mrf.mxu0
    %v233 = vadd.f32 0.0, %v232
    %234 = vmatmul.f32.gmra.mxu0 %v123
    %v235 = vpop.f32.mrf.mxu0
    %v236 = vadd.f32 0.0, %v235
    %237 = vmatmul.f32.gmra.mxu0 %v126
    %v238 = vpop.f32.mrf.mxu0
    %v239 = vadd.f32 0.0, %v238
    %240 = vmatmul.f32.gmra.mxu0 %v129
    %v241 = vpop.f32.mrf.mxu0
    %v242 = vadd.f32 0.0, %v241
    %243 = vmatmul.f32.gmra.mxu0 %v132
    %v244 = vpop.f32.mrf.mxu0
    %v245 = vadd.f32 0.0, %v244
    %246 = vmatmul.f32.gmra.mxu0 %v135
    %v247 = vpop.f32.mrf.mxu0
    %v248 = vadd.f32 0.0, %v247
    %249 = vmatmul.f32.gmra.mxu0 %v138
    %v250 = vpop.f32.mrf.mxu0
    %v251 = vadd.f32 0.0, %v250
    %252 = vmatmul.f32.gmra.mxu0 %v141
    %v253 = vpop.f32.mrf.mxu0
    %v254 = vadd.f32 0.0, %v253
    %255 = vmatmul.f32.gmra.mxu0 %v144
    %v256 = vpop.f32.mrf.mxu0
    %v257 = vadd.f32 0.0, %v256
    %258 = vmatmul.f32.gmra.mxu0 %v147
    %v259 = vpop.f32.mrf.mxu0
    %v260 = vadd.f32 0.0, %v259
    %261 = vmatmul.f32.gmra.mxu0 %v150
    %v262 = vpop.f32.mrf.mxu0
    %v263 = vadd.f32 0.0, %v262
    %264 = vdwg.mxu0
    %v265 = vld [vmem:[%s2] sm:$0xff]
    %v266 = vld [vmem:[%s2 + $0x8] sm:$0xff]
    %v267 = vld [vmem:[%s2 + $0x10] sm:$0xff]
    %v268 = vld [vmem:[%s2 + $0x18] sm:$0xff]
    %v269 = vld [vmem:[%s2 + $0x20] sm:$0xff]
    %v270 = vld [vmem:[%s2 + $0x28] sm:$0xff]
    %v271 = vld [vmem:[%s2 + $0x30] sm:$0xff]
    %v272 = vld [vmem:[%s2 + $0x38] sm:$0xff]
    %v273 = vld [vmem:[%s2 + $0x40] sm:$0xff]
    %v274 = vld [vmem:[%s2 + $0x48] sm:$0xff]
    %v275 = vld [vmem:[%s2 + $0x50] sm:$0xff]
    %v276 = vld [vmem:[%s2 + $0x58] sm:$0xff]
    %v277 = vld [vmem:[%s2 + $0x60] sm:$0xff]
    %v278 = vld [vmem:[%s2 + $0x68] sm:$0xff]
    %v279 = vld [vmem:[%s2 + $0x70] sm:$0xff]
    %v280 = vld [vmem:[%s2 + $0x78] sm:$0xff]
    %281 = vmatpush.msra.mxu0 %v280
    %282 = vmatpush.msra.mxu0 %v279
    %283 = vmatpush.msra.mxu0 %v278
    %284 = vmatpush.msra.mxu0 %v277
    %285 = vmatpush.msra.mxu0 %v276
    %286 = vmatpush.msra.mxu0 %v275
    %287 = vmatpush.msra.mxu0 %v274
    %288 = vmatpush.msra.mxu0 %v273
    %289 = vmatpush.msra.mxu0 %v272
    %290 = vmatpush.msra.mxu0 %v271
    %291 = vmatpush.msra.mxu0 %v270
    %292 = vmatpush.msra.mxu0 %v269
    %293 = vmatpush.msra.mxu0 %v268
    %294 = vmatpush.msra.mxu0 %v267
    %295 = vmatpush.msra.mxu0 %v266
    %296 = vmatpush.msra.mxu0 %v265
    %297 = vmatmul.f32.gmra.mxu0 %v170
    %v298 = vpop.f32.mrf.mxu0
    %v299 = vadd.f32 0.0, %v298
    %300 = vmatmul.f32.gmra.mxu0 %v173
    %v301 = vpop.f32.mrf.mxu0
    %v302 = vadd.f32 0.0, %v301
    %303 = vmatmul.f32.gmra.mxu0 %v176
    %v304 = vpop.f32.mrf.mxu0
    %v305 = vadd.f32 0.0, %v304
    %306 = vmatmul.f32.gmra.mxu0 %v179
    %v307 = vpop.f32.mrf.mxu0
    %v308 = vadd.f32 0.0, %v307
    %309 = vmatmul.f32.gmra.mxu0 %v182
    %v310 = vpop.f32.mrf.mxu0
    %v311 = vadd.f32 0.0, %v310
    %312 = vmatmul.f32.gmra.mxu0 %v185
    %v313 = vpop.f32.mrf.mxu0
    %v314 = vadd.f32 0.0, %v313
    %315 = vmatmul.f32.gmra.mxu0 %v188
    %v316 = vpop.f32.mrf.mxu0
    %v317 = vadd.f32 0.0, %v316
    %318 = vmatmul.f32.gmra.mxu0 %v191
    %v319 = vpop.f32.mrf.mxu0
    %v320 = vadd.f32 0.0, %v319
    %321 = vmatmul.f32.gmra.mxu0 %v194
    %v322 = vpop.f32.mrf.mxu0
    %v323 = vadd.f32 0.0, %v322
    %324 = vmatmul.f32.gmra.mxu0 %v197
    %v325 = vpop.f32.mrf.mxu0
    %v326 = vadd.f32 0.0, %v325
    %327 = vmatmul.f32.gmra.mxu0 %v200
    %v328 = vpop.f32.mrf.mxu0
    %v329 = vadd.f32 0.0, %v328
    %330 = vmatmul.f32.gmra.mxu0 %v203
    %v331 = vpop.f32.mrf.mxu0
    %v332 = vadd.f32 0.0, %v331
    %333 = vmatmul.f32.gmra.mxu0 %v206
    %v334 = vpop.f32.mrf.mxu0
    %v335 = vadd.f32 0.0, %v334
    %336 = vmatmul.f32.gmra.mxu0 %v209
    %v337 = vpop.f32.mrf.mxu0
    %v338 = vadd.f32 0.0, %v337
    %339 = vmatmul.f32.gmra.mxu0 %v212
    %v340 = vpop.f32.mrf.mxu0
    %v341 = vadd.f32 0.0, %v340
    %342 = vmatmul.f32.gmra.mxu0 %v215
    %v343 = vpop.f32.mrf.mxu0
    %v344 = vadd.f32 0.0, %v343
    %345 = vmatmul.f32.gmra.mxu0 %v218
    %v346 = vpop.f32.mrf.mxu0
    %v347 = vadd.f32 0.0, %v346
    %348 = vmatmul.f32.gmra.mxu0 %v221
    %v349 = vpop.f32.mrf.mxu0
    %v350 = vadd.f32 0.0, %v349
    %351 = vmatmul.f32.gmra.mxu0 %v224
    %v352 = vpop.f32.mrf.mxu0
    %v353 = vadd.f32 0.0, %v352
    %354 = vmatmul.f32.gmra.mxu0 %v227
    %v355 = vpop.f32.mrf.mxu0
    %v356 = vadd.f32 0.0, %v355
    %357 = vmatmul.f32.gmra.mxu0 %v230
    %v358 = vpop.f32.mrf.mxu0
    %v359 = vadd.f32 0.0, %v358
    %360 = vmatmul.f32.gmra.mxu0 %v233
    %v361 = vpop.f32.mrf.mxu0
    %v362 = vadd.f32 0.0, %v361
    %363 = vmatmul.f32.gmra.mxu0 %v236
    %v364 = vpop.f32.mrf.mxu0
    %v365 = vadd.f32 0.0, %v364
    %366 = vmatmul.f32.gmra.mxu0 %v239
    %v367 = vpop.f32.mrf.mxu0
    %v368 = vadd.f32 0.0, %v367
    %369 = vmatmul.f32.gmra.mxu0 %v242
    %v370 = vpop.f32.mrf.mxu0
    %v371 = vadd.f32 0.0, %v370
    %372 = vmatmul.f32.gmra.mxu0 %v245
    %v373 = vpop.f32.mrf.mxu0
    %v374 = vadd.f32 0.0, %v373
    %375 = vmatmul.f32.gmra.mxu0 %v248
    %v376 = vpop.f32.mrf.mxu0
    %v377 = vadd.f32 0.0, %v376
    %378 = vmatmul.f32.gmra.mxu0 %v251
    %v379 = vpop.f32.mrf.mxu0
    %v380 = vadd.f32 0.0, %v379
    %381 = vmatmul.f32.gmra.mxu0 %v254
    %v382 = vpop.f32.mrf.mxu0
    %v383 = vadd.f32 0.0, %v382
    %384 = vmatmul.f32.gmra.mxu0 %v257
    %v385 = vpop.f32.mrf.mxu0
    %v386 = vadd.f32 0.0, %v385
    %387 = vmatmul.f32.gmra.mxu0 %v260
    %v388 = vpop.f32.mrf.mxu0
    %v389 = vadd.f32 0.0, %v388
    %390 = vmatmul.f32.gmra.mxu0 %v263
    %v391 = vpop.f32.mrf.mxu0
    %v392 = vadd.f32 0.0, %v391
    %393 = vdwg.mxu0
    %vm394 = vcmask 15360
    %395 = vst.msk [vmem:[%s4] sm:$0xff] %vm394, %v299
    %396 = vst.msk [vmem:[%s4 + $0x8] sm:$0xff] %vm394, %v302
    %397 = vst.msk [vmem:[%s4 + $0x10] sm:$0xff] %vm394, %v305
    %398 = vst.msk [vmem:[%s4 + $0x18] sm:$0xff] %vm394, %v308
    %399 = vst.msk [vmem:[%s4 + $0x20] sm:$0xff] %vm394, %v311
    %400 = vst.msk [vmem:[%s4 + $0x28] sm:$0xff] %vm394, %v314
    %401 = vst.msk [vmem:[%s4 + $0x30] sm:$0xff] %vm394, %v317
    %402 = vst.msk [vmem:[%s4 + $0x38] sm:$0xff] %vm394, %v320
    %403 = vst.msk [vmem:[%s4 + $0x40] sm:$0xff] %vm394, %v323
    %404 = vst.msk [vmem:[%s4 + $0x48] sm:$0xff] %vm394, %v326
    %405 = vst.msk [vmem:[%s4 + $0x50] sm:$0xff] %vm394, %v329
    %406 = vst.msk [vmem:[%s4 + $0x58] sm:$0xff] %vm394, %v332
    %407 = vst.msk [vmem:[%s4 + $0x60] sm:$0xff] %vm394, %v335
    %408 = vst.msk [vmem:[%s4 + $0x68] sm:$0xff] %vm394, %v338
    %409 = vst.msk [vmem:[%s4 + $0x70] sm:$0xff] %vm394, %v341
    %410 = vst.msk [vmem:[%s4 + $0x78] sm:$0xff] %vm394, %v344
    %411 = vst.msk [vmem:[%s4 + $0x80] sm:$0xff] %vm394, %v347
    %412 = vst.msk [vmem:[%s4 + $0x88] sm:$0xff] %vm394, %v350
    %413 = vst.msk [vmem:[%s4 + $0x90] sm:$0xff] %vm394, %v353
    %414 = vst.msk [vmem:[%s4 + $0x98] sm:$0xff] %vm394, %v356
    %415 = vst.msk [vmem:[%s4 + $0xa0] sm:$0xff] %vm394, %v359
    %416 = vst.msk [vmem:[%s4 + $0xa8] sm:$0xff] %vm394, %v362
    %417 = vst.msk [vmem:[%s4 + $0xb0] sm:$0xff] %vm394, %v365
    %418 = vst.msk [vmem:[%s4 + $0xb8] sm:$0xff] %vm394, %v368
    %419 = vst.msk [vmem:[%s4 + $0xc0] sm:$0xff] %vm394, %v371
    %420 = vst.msk [vmem:[%s4 + $0xc8] sm:$0xff] %vm394, %v374
    %421 = vst.msk [vmem:[%s4 + $0xd0] sm:$0xff] %vm394, %v377
    %422 = vst.msk [vmem:[%s4 + $0xd8] sm:$0xff] %vm394, %v380
    %423 = vst.msk [vmem:[%s4 + $0xe0] sm:$0xff] %vm394, %v383
    %424 = vst.msk [vmem:[%s4 + $0xe8] sm:$0xff] %vm394, %v386
    %425 = vst.msk [vmem:[%s4 + $0xf0] sm:$0xff] %vm394, %v389
    %426 = vst.msk [vmem:[%s4 + $0xf8] sm:$0xff] %vm394, %v392
    %v427 = vlaneseq
    %v428 = vand.u32 %v427, 127
    %vm429 = vcmp.eq.s32.totalorder %v428, 64
    %v430 = vsel %vm429, 1.0, %v170
    %v431 = vsel %vm429, 1.0, %v173
    %v432 = vsel %vm429, 1.0, %v176
    %v433 = vsel %vm429, 1.0, %v179
    %v434 = vsel %vm429, 1.0, %v182
    %v435 = vsel %vm429, 1.0, %v185
    %v436 = vsel %vm429, 1.0, %v188
    %v437 = vsel %vm429, 1.0, %v191
    %v438 = vsel %vm429, 1.0, %v194
    %v439 = vsel %vm429, 1.0, %v197
    %v440 = vsel %vm429, 1.0, %v200
    %v441 = vsel %vm429, 1.0, %v203
    %v442 = vsel %vm429, 1.0, %v206
    %v443 = vsel %vm429, 1.0, %v209
    %v444 = vsel %vm429, 1.0, %v212
    %v445 = vsel %vm429, 1.0, %v215
    %v446 = vsel %vm429, 1.0, %v218
    %v447 = vsel %vm429, 1.0, %v221
    %v448 = vsel %vm429, 1.0, %v224
    %v449 = vsel %vm429, 1.0, %v227
    %v450 = vsel %vm429, 1.0, %v230
    %v451 = vsel %vm429, 1.0, %v233
    %v452 = vsel %vm429, 1.0, %v236
    %v453 = vsel %vm429, 1.0, %v239
    %v454 = vsel %vm429, 1.0, %v242
    %v455 = vsel %vm429, 1.0, %v245
    %v456 = vsel %vm429, 1.0, %v248
    %v457 = vsel %vm429, 1.0, %v251
    %v458 = vsel %vm429, 1.0, %v254
    %v459 = vsel %vm429, 1.0, %v257
    %v460 = vsel %vm429, 1.0, %v260
    %v461 = vsel %vm429, 1.0, %v263
    %v462 = vpack.c.bf16 %v430, %v430
    %v463 = vpack.c.bf16 %v431, %v431
    %v464 = vpack.c.bf16 %v432, %v432
    %v465 = vpack.c.bf16 %v433, %v433
    %v466 = vpack.c.bf16 %v434, %v434
    %v467 = vpack.c.bf16 %v435, %v435
    %v468 = vpack.c.bf16 %v436, %v436
    %v469 = vpack.c.bf16 %v437, %v437
    %v470 = vpack.c.bf16 %v438, %v438
    %v471 = vpack.c.bf16 %v439, %v439
    %v472 = vpack.c.bf16 %v440, %v440
    %v473 = vpack.c.bf16 %v441, %v441
    %v474 = vpack.c.bf16 %v442, %v442
    %v475 = vpack.c.bf16 %v443, %v443
    %v476 = vpack.c.bf16 %v444, %v444
    %v477 = vpack.c.bf16 %v445, %v445
    %v478 = vpack.c.bf16 %v446, %v446
    %v479 = vpack.c.bf16 %v447, %v447
    %v480 = vpack.c.bf16 %v448, %v448
    %v481 = vpack.c.bf16 %v449, %v449
    %v482 = vpack.c.bf16 %v450, %v450
    %v483 = vpack.c.bf16 %v451, %v451
    %v484 = vpack.c.bf16 %v452, %v452
    %v485 = vpack.c.bf16 %v453, %v453
    %v486 = vpack.c.bf16 %v454, %v454
    %v487 = vpack.c.bf16 %v455, %v455
    %v488 = vpack.c.bf16 %v456, %v456
    %v489 = vpack.c.bf16 %v457, %v457
    %v490 = vpack.c.bf16 %v458, %v458
    %v491 = vpack.c.bf16 %v459, %v459
    %v492 = vpack.c.bf16 %v460, %v460
    %v493 = vpack.c.bf16 %v461, %v461
    %494 = vst [vmem:[#allocation2] sm:$0xf] %v462
    %495 = vst [vmem:[#allocation2 + $0x4] sm:$0xf] %v463
    %496 = vst [vmem:[#allocation2 + $0x8] sm:$0xf] %v464
    %497 = vst [vmem:[#allocation2 + $0xc] sm:$0xf] %v465
    %498 = vst [vmem:[#allocation2 + $0x10] sm:$0xf] %v466
    %499 = vst [vmem:[#allocation2 + $0x14] sm:$0xf] %v467
    %500 = vst [vmem:[#allocation2 + $0x18] sm:$0xf] %v468
    %501 = vst [vmem:[#allocation2 + $0x1c] sm:$0xf] %v469
    %502 = vst [vmem:[#allocation2 + $0x20] sm:$0xf] %v470
    %503 = vst [vmem:[#allocation2 + $0x24] sm:$0xf] %v471
    %504 = vst [vmem:[#allocation2 + $0x28] sm:$0xf] %v472
    %505 = vst [vmem:[#allocation2 + $0x2c] sm:$0xf] %v473
    %506 = vst [vmem:[#allocation2 + $0x30] sm:$0xf] %v474
    %507 = vst [vmem:[#allocation2 + $0x34] sm:$0xf] %v475
    %508 = vst [vmem:[#allocation2 + $0x38] sm:$0xf] %v476
    %509 = vst [vmem:[#allocation2 + $0x3c] sm:$0xf] %v477
    %510 = vst [vmem:[#allocation2 + $0x40] sm:$0xf] %v478
    %511 = vst [vmem:[#allocation2 + $0x44] sm:$0xf] %v479
    %512 = vst [vmem:[#allocation2 + $0x48] sm:$0xf] %v480
    %513 = vst [vmem:[#allocation2 + $0x4c] sm:$0xf] %v481
    %514 = vst [vmem:[#allocation2 + $0x50] sm:$0xf] %v482
    %515 = vst [vmem:[#allocation2 + $0x54] sm:$0xf] %v483
    %516 = vst [vmem:[#allocation2 + $0x58] sm:$0xf] %v484
    %517 = vst [vmem:[#allocation2 + $0x5c] sm:$0xf] %v485
    %518 = vst [vmem:[#allocation2 + $0x60] sm:$0xf] %v486
    %519 = vst [vmem:[#allocation2 + $0x64] sm:$0xf] %v487
    %520 = vst [vmem:[#allocation2 + $0x68] sm:$0xf] %v488
    %521 = vst [vmem:[#allocation2 + $0x6c] sm:$0xf] %v489
    %522 = vst [vmem:[#allocation2 + $0x70] sm:$0xf] %v490
    %523 = vst [vmem:[#allocation2 + $0x74] sm:$0xf] %v491
    %524 = vst [vmem:[#allocation2 + $0x78] sm:$0xf] %v492
    %525 = vst [vmem:[#allocation2 + $0x7c] sm:$0xf] %v493
    // Predicated region
    $region14: #{tpu_custom_call.1} parent=1 // pred_check
      _
    $region15: #{tpu_custom_call.1} parent=1 // pred_check_branch
      %527 = sbr.rel (0) target = $region17
    $region16: #{tpu_custom_call.1} parent=1 // pred_region
      %529 = vsyncadd [#allocation3], 0
      %s530 = sshll.u32 [#allocation2], 4
      %s531 = int_to_ptr.vmem [resolvable:$true] %s530
      %s532 = sshll.u32 %s3, 4
      %s533 = int_to_ptr.hbm [resolvable:$true] %s532
      %538 = dma.vmem_to_hbm [thread:$0]  %s531, 2048, %s533, [#allocation3], 64, 64, 4
    $region17: #{tpu_custom_call.1} parent=1 // pred_fallthru
      _
    // Predicated region
    $region18: #{tpu_custom_call.1} parent=1 // pred_check
      _
    $region19: #{tpu_custom_call.1} parent=1 // pred_check_branch
      %540 = sbr.rel (0) target = $region21
    $region20: #{tpu_custom_call.1} parent=1 // pred_region
      _
    $region21: #{tpu_custom_call.1} parent=1 // pred_fallthru
      _
    // Predicated region
    $region22: #{tpu_custom_call.1} parent=1 // pred_check
      _
    $region23: #{tpu_custom_call.1} parent=1 // pred_check_branch
      %542 = sbr.rel (0) target = $region25
    $region24: #{tpu_custom_call.1} parent=1 // pred_region
      %544 = dma.done [#allocation3], 2048
    $region25: #{tpu_custom_call.1} parent=1 // pred_fallthru
      _
    // Predicated region
    $region26: #{tpu_custom_call.1} parent=1 // pred_check
      _
    $region27: #{tpu_custom_call.1} parent=1 // pred_check_branch
      %546 = sbr.rel (0) target = $region29
    $region28: #{tpu_custom_call.1} parent=1 // pred_region
      _
    $region29: #{tpu_custom_call.1} parent=1 // pred_fallthru
      _
    %547 = vsyncpa [#allocation3], 1

</llo_original>
